<compile_context>
chip_gen: v7x
topology: tpu7x:2x2x1
jax: 0.10.0
libtpu: 0.0.40
codegen_flags: <defaults>
</compile_context>

<pallas_src>
import jax
import jax.numpy as jnp
from jax import lax
from jax.experimental import pallas as pl
from jax.experimental.pallas import tpu as pltpu

NUM_CLASSES = 5
FEATURE_DIM = 1024
C_PAD = 8        # pad class dim to one sublane tile; weight stays [C_PAD, F] = 32 KiB
B_TILE = 1024    # 4 MiB f32 x-block; ~85% of HBM roofline, fits all gens' default VMEM


def _round_up(n, m):
    return ((n + m - 1) // m) * m


def _linear_kernel(x_ref, w_ref, b_ref, o_ref):
    """One batch tile: o = x @ w.T + b (contract the feature/lane axis on the MXU)."""
    acc = lax.dot_general(
        x_ref[...],                                   # [tile, F]
        w_ref[...],                                   # [C_PAD, F]
        dimension_numbers=(((1,), (1,)), ((), ())),   # contract F with F (trans_b form)
        preferred_element_type=jnp.float32,
    )                                                 # -> [tile, C_PAD]
    o_ref[...] = (acc + b_ref[...]).astype(o_ref.dtype)


@jax.jit
def logistic_regression_forward(x, weight_padded, bias_padded):
    """x: [B, FEATURE_DIM] f32, weight_padded: [C_PAD, FEATURE_DIM], bias_padded: [1, C_PAD].

    Returns scores [B, NUM_CLASSES], matching nn.Linear semantics.
    """
    B, F = x.shape
    assert F == FEATURE_DIM

    # Tile choice: full B_TILE for large batches, shrink (sublane-aligned) for small ones.
    tile = min(B_TILE, _round_up(B, 8))
    B_pad = _round_up(B, tile)
    if B_pad != B:  # static-shape branch; no pad op emitted when already aligned
        x = jnp.pad(x, ((0, B_pad - B), (0, 0)))
    grid = (B_pad // tile,)

    cost = pl.CostEstimate(
        flops=2 * B_pad * FEATURE_DIM * C_PAD,
        bytes_accessed=B_pad * FEATURE_DIM * 4 + C_PAD * FEATURE_DIM * 4 + B_pad * C_PAD * 4,
        transcendentals=0,
    )

    out_padded = pl.pallas_call(
        _linear_kernel,
        out_shape=jax.ShapeDtypeStruct((B_pad, C_PAD), jnp.float32),
        grid=grid,
        in_specs=[
            # x streams through, double-buffered by the pipeline.
            pl.BlockSpec((tile, FEATURE_DIM), lambda i: (i, 0)),
            # weight/bias: constant block index -> DMA'd once, VMEM-resident.
            pl.BlockSpec((C_PAD, FEATURE_DIM), lambda i: (0, 0)),
            pl.BlockSpec((1, C_PAD), lambda i: (0, 0)),
        ],
        out_specs=pl.BlockSpec((tile, C_PAD), lambda i: (i, 0)),
        compiler_params=pltpu.CompilerParams(
            dimension_semantics=("parallel",),  # shards batch tiles across v7x's 2 TCs
        ),
        cost_estimate=cost,
    )(x, weight_padded, bias_padded)

    # Trailing slice is tiny relative to the x stream; kept here for API parity with
    # nn.Linear. Consumers that can fuse it may take the padded [B_pad, C_PAD] instead.
    return out_padded[:B, :NUM_CLASSES]


def pad_params(weight, bias):
    """Build kernel-layout parameters ONCE (outside the jitted forward)."""
    w_pad = jnp.zeros((C_PAD, FEATURE_DIM), jnp.float32).at[:NUM_CLASSES, :].set(weight)
    b_pad = jnp.zeros((1, C_PAD), jnp.float32).at[0, :NUM_CLASSES].set(bias)
    return w_pad, b_pad


if __name__ == "__main__":
    key = jax.random.PRNGKey(0)
    kx, kw, kb = jax.random.split(key, 3)

    B = 8  # small, sublane-aligned batch for the smoke test

    # Deterministic synthetic parameters (shapes from __init__).
    bound = 1.0 / (FEATURE_DIM ** 0.5)
    weight = jax.random.uniform(
        kw, (NUM_CLASSES, FEATURE_DIM), jnp.float32, minval=-bound, maxval=bound
    )
    bias = jax.random.uniform(
        kb, (NUM_CLASSES,), jnp.float32, minval=-bound, maxval=bound
    )
    scale_factor = jnp.array([10.0], dtype=jnp.float32)  # unused in forward()

    x = jax.random.normal(kx, (B, FEATURE_DIM), jnp.float32)

    # Parameter re-layout done once, outside the jitted forward.
    w_pad, b_pad = pad_params(weight, bias)
    jax.block_until_ready((w_pad, b_pad))

    scores = logistic_regression_forward(x, w_pad, b_pad)
    jax.block_until_ready(scores)

    # Sanity check against plain-JAX reference.
    ref = x @ weight.T + bias
    assert scores.shape == (B, NUM_CLASSES)
    assert jnp.allclose(scores, ref, atol=2e-4, rtol=2e-4), float(
        jnp.max(jnp.abs(scores - ref))
    )

    print("KERNEL_OK")
</pallas_src>

<mosaic_0001>
module attributes {stable_mosaic.version = 11 : i64} {
  func.func @_linear_kernel(%arg0: i32, %arg1: memref<8x1024xf32, #tpu.memory_space<vmem>>, %arg2: memref<8x1024xf32, #tpu.memory_space<vmem>>, %arg3: memref<1x8xf32, #tpu.memory_space<vmem>>, %arg4: memref<8x8xf32, #tpu.memory_space<vmem>>) attributes {dimension_semantics = [#tpu.dimension_semantics<parallel>], iteration_bounds = array<i64: 1>, scalar_prefetch = 0 : i64, scratch_operands = 0 : i64, tpu.core_type = #tpu.core_type<tc>, window_params = [{transform_indices = @transform_0, window_bounds = array<i64: 8, 1024>}, {pipeline_mode = #tpu.pipeline_mode<synchronous>, transform_indices = @transform_1, window_bounds = array<i64: 8, 1024>}, {pipeline_mode = #tpu.pipeline_mode<synchronous>, transform_indices = @transform_2, window_bounds = array<i64: 1, 8>}, {transform_indices = @transform_3, window_bounds = array<i64: 8, 8>}]} {
    %c0 = arith.constant 0 : index
    %c0_0 = arith.constant 0 : index
    %0 = vector.load %arg1[%c0, %c0_0] : memref<8x1024xf32, #tpu.memory_space<vmem>>, vector<8x1024xf32>
    %c0_1 = arith.constant 0 : index
    %c0_2 = arith.constant 0 : index
    %1 = vector.load %arg2[%c0_1, %c0_2] : memref<8x1024xf32, #tpu.memory_space<vmem>>, vector<8x1024xf32>
    %cst = arith.constant dense<0.000000e+00> : vector<8x8xf32>
    %2 = tpu.matmul %0, %1, %cst {dimension_numbers = #tpu.dot_dimension_numbers<[1], [1], [0], [0], [0, 0, 1, 0], [], []>} : vector<8x1024xf32>, vector<8x1024xf32>, vector<8x8xf32> -> vector<8x8xf32>
    %c0_3 = arith.constant 0 : index
    %c0_4 = arith.constant 0 : index
    %3 = vector.load %arg3[%c0_3, %c0_4] : memref<1x8xf32, #tpu.memory_space<vmem>>, vector<1x8xf32>
    %4 = vector.broadcast %3 : vector<1x8xf32> to vector<8x8xf32>
    %5 = arith.addf %2, %4 : vector<8x8xf32>
    %c0_5 = arith.constant 0 : index
    %c0_6 = arith.constant 0 : index
    %6 = vector.load %arg4[%c0_5, %c0_6] : memref<8x8xf32, #tpu.memory_space<vmem>>, vector<8x8xf32>
    tpu.vector_store %arg4[%c0_5, %c0_6], %5 {strides = array<i32>} : memref<8x8xf32, #tpu.memory_space<vmem>>, vector<8x8xf32>,
    return
  }
  func.func @transform_0(%arg0: i32) -> (i32, i32) {
    %c0_i32 = arith.constant 0 : i32
    %c0_i32_0 = arith.constant 0 : i32
    return %arg0, %c0_i32 : i32, i32
  }
  func.func @transform_1(%arg0: i32) -> (i32, i32) {
    %c0_i32 = arith.constant 0 : i32
    %c0_i32_0 = arith.constant 0 : i32
    %c0_i32_1 = arith.constant 0 : i32
    return %c0_i32, %c0_i32_0 : i32, i32
  }
  func.func @transform_2(%arg0: i32) -> (i32, i32) {
    %c0_i32 = arith.constant 0 : i32
    %c0_i32_0 = arith.constant 0 : i32
    %c0_i32_1 = arith.constant 0 : i32
    return %c0_i32, %c0_i32_0 : i32, i32
  }
  func.func @transform_3(%arg0: i32) -> (i32, i32) {
    %c0_i32 = arith.constant 0 : i32
    %c0_i32_0 = arith.constant 0 : i32
    return %arg0, %c0_i32 : i32, i32
  }
}

</mosaic_0001>

<llo_original>
// kernel: logistic_regression_forward.1
$region0: #{logistic_regression_forward.1}
  #allocation0 [shape = 'u32[]', space=smem, size = 0x4, offset = 0x4, fixed_abs, tag = 'smem constant byte address 0x4 - core index']
  #allocation1 [shape = 'u32[144,128]{1,0:T(1,128)}', space=vmem, size = 0x12000, scoped, tag = 'internal scratch']
  %s0 = inlined_call_operand.hbm [shape: f32[8,1024], index: 0, kind: input, shape index: {}]
  %s1 = inlined_call_operand.hbm [shape: f32[8,1024], index: 1, kind: input, shape index: {}]
  %s2 = inlined_call_operand.vmem [shape: f32[1,8], index: 2, kind: input, shape index: {}]
  %s3 = inlined_call_operand.hbm [shape: f32[8,8], index: 3, kind: output, shape index: {}]
  %s4 = sld [smem:[#allocation0]]
  $region30: #{logistic_regression_forward.1} parent=0
    _
  %s6 = ssub.s32 1, %s4
  %s7 = scalar_select 0, %s6, %s4
  $region1: #{logistic_regression_forward.1} parent=0
    #allocation2 [shape = 'u8[32768]{0}', space=vmem, size = 0x8000, scoped, tag = 'input window, operand 0, single buffered']
    #allocation3 [shape = 's32[1]{0}', space=sflag, size = 0x4, scoped, tag = 'scoped memory for logistic_regression_forward.1']
    #allocation4 [shape = 's32[1]{0}', space=sflag, size = 0x4, scoped, tag = 'scoped memory for logistic_regression_forward.1']
    #allocation5 [shape = 'u8[32768]{0}', space=vmem, size = 0x8000, scoped, tag = 'input window, operand 1, single buffered']
    #allocation6 [shape = 's32[1]{0}', space=sflag, size = 0x4, scoped, tag = 'scoped memory for logistic_regression_forward.1']
    #allocation7 [shape = 'u8[4096]{0}', space=vmem, size = 0x1000, scoped, tag = 'output window, operand 0, single buffered']
    %8 = vsyncpa [#allocation3], 0
    %9 = vsyncpa [#allocation6], 0
    %10 = vsyncpa [#allocation4], 0
    // Predicated region
    $region2: #{logistic_regression_forward.1} parent=1 // pred_check
      _
    $region3: #{logistic_regression_forward.1} parent=1 // pred_check_branch
      %12 = sbr.rel (0) target = $region5
    $region4: #{logistic_regression_forward.1} parent=1 // pred_region
      %s14 = ssub.s32 1024, 1024
      %15 = vsyncadd [#allocation3], %s14
      %s17 = sshll.u32 [#allocation2], 4
      %s18 = int_to_ptr.vmem [resolvable:$true] %s17
      %20 = dma.hbm_to_vmem [thread:$0]  %s0, 1024, %s18, [#allocation3]
    $region5: #{logistic_regression_forward.1} parent=1 // pred_fallthru
      _
    // Predicated region
    $region6: #{logistic_regression_forward.1} parent=1 // pred_check
      _
    $region7: #{logistic_regression_forward.1} parent=1 // pred_check_branch
      %22 = sbr.rel (0) target = $region9
    $region8: #{logistic_regression_forward.1} parent=1 // pred_region
      %s24 = ssub.s32 1024, 1024
      %25 = vsyncadd [#allocation6], %s24
      %s27 = sshll.u32 [#allocation5], 4
      %s28 = int_to_ptr.vmem [resolvable:$true] %s27
      %30 = dma.hbm_to_vmem [thread:$0]  %s1, 1024, %s28, [#allocation6]
    $region9: #{logistic_regression_forward.1} parent=1 // pred_fallthru
      _
    // Predicated region
    $region10: #{logistic_regression_forward.1} parent=1 // pred_check
      _
    $region11: #{logistic_regression_forward.1} parent=1 // pred_check_branch
      %32 = sbr.rel (0) target = $region13
    $region12: #{logistic_regression_forward.1} parent=1 // pred_region
      _
    $region13: #{logistic_regression_forward.1} parent=1 // pred_fallthru
      _
    // Predicated region
    $region14: #{logistic_regression_forward.1} parent=1 // pred_check
      _
    $region15: #{logistic_regression_forward.1} parent=1 // pred_check_branch
      %34 = sbr.rel (0) target = $region17
    $region16: #{logistic_regression_forward.1} parent=1 // pred_region
      %35 = dma.done [#allocation3], 1024
    $region17: #{logistic_regression_forward.1} parent=1 // pred_fallthru
      _
    // Predicated region
    $region18: #{logistic_regression_forward.1} parent=1 // pred_check
      _
    $region19: #{logistic_regression_forward.1} parent=1 // pred_check_branch
      %37 = sbr.rel (0) target = $region21
    $region20: #{logistic_regression_forward.1} parent=1 // pred_region
      %38 = dma.done [#allocation6], 1024
    $region21: #{logistic_regression_forward.1} parent=1 // pred_fallthru
      _
    %v39 = vld [vmem:[#allocation2] sm:$0xff]
    %v40 = vld [vmem:[#allocation2 + $0x8] sm:$0xff]
    %v41 = vld [vmem:[#allocation2 + $0x10] sm:$0xff]
    %v42 = vld [vmem:[#allocation2 + $0x18] sm:$0xff]
    %v43 = vld [vmem:[#allocation2 + $0x20] sm:$0xff]
    %v44 = vld [vmem:[#allocation2 + $0x28] sm:$0xff]
    %v45 = vld [vmem:[#allocation2 + $0x30] sm:$0xff]
    %v46 = vld [vmem:[#allocation2 + $0x38] sm:$0xff]
    %v47 = vld [vmem:[#allocation5] sm:$0xff]
    %v48 = vld [vmem:[#allocation5 + $0x8] sm:$0xff]
    %v49 = vld [vmem:[#allocation5 + $0x10] sm:$0xff]
    %v50 = vld [vmem:[#allocation5 + $0x18] sm:$0xff]
    %v51 = vld [vmem:[#allocation5 + $0x20] sm:$0xff]
    %v52 = vld [vmem:[#allocation5 + $0x28] sm:$0xff]
    %v53 = vld [vmem:[#allocation5 + $0x30] sm:$0xff]
    %v54 = vld [vmem:[#allocation5 + $0x38] sm:$0xff]
    %v55 = vld [vmem:[%s2] sm:$0x1]
    %v57 = vlaneseq
    %v58 = vshrl.u32 %v57, 7
    %v59 = vsub.s32 0, %v58
    %v60 = vrot.slane %v55, %v59
    %62 = vmatprep.subr.mxu0 %v48
    %63 = vmatpush1.xpose.msra.mxu0 %v47
    %64 = vmatprep.subr.mxu0 0.0
    %65 = vmatpush1.xpose.msra.mxu0 0.0
    %66 = vmatprep.subr.mxu0 0.0
    %67 = vmatpush1.xpose.msra.mxu0 0.0
    %68 = vmatprep.subr.mxu0 0.0
    %69 = vmatpush1.xpose.msra.mxu0 0.0
    %70 = vmatprep.subr.mxu0 0.0
    %71 = vmatpush1.xpose.msra.mxu0 0.0
    %72 = vmatprep.subr.mxu0 0.0
    %73 = vmatpush1.xpose.msra.mxu0 0.0
    %74 = vmatprep.subr.mxu0 0.0
    %75 = vmatpush1.xpose.msra.mxu0 0.0
    %76 = vmatprep.subr.mxu0 0.0
    %77 = vmatpush1.xpose.msra.mxu0 0.0
    %78 = vmatprep.subr.mxu0 0.0
    %79 = vmatpush1.xpose.msra.mxu0 0.0
    %80 = vmatprep.subr.mxu0 0.0
    %81 = vmatpush1.xpose.msra.mxu0 0.0
    %82 = vmatprep.subr.mxu0 0.0
    %83 = vmatpush1.xpose.msra.mxu0 0.0
    %84 = vmatprep.subr.mxu0 0.0
    %85 = vmatpush1.xpose.msra.mxu0 0.0
    %86 = vmatprep.subr.mxu0 0.0
    %87 = vmatpush1.xpose.msra.mxu0 0.0
    %88 = vmatprep.subr.mxu0 0.0
    %89 = vmatpush1.xpose.msra.mxu0 0.0
    %90 = vmatprep.subr.mxu0 0.0
    %91 = vmatpush1.xpose.msra.mxu0 0.0
    %92 = vmatprep.subr.mxu0 0.0
    %93 = vmatpush1.xpose.msra.mxu0 0.0
    %94 = vmatprep.subr.mxu0 0.0
    %95 = vmatpush1.xpose.msra.mxu0 0.0
    %96 = vmatprep.subr.mxu0 0.0
    %97 = vmatpush1.xpose.msra.mxu0 0.0
    %98 = vmatprep.subr.mxu0 0.0
    %99 = vmatpush1.xpose.msra.mxu0 0.0
    %100 = vmatprep.subr.mxu0 0.0
    %101 = vmatpush1.xpose.msra.mxu0 0.0
    %102 = vmatprep.subr.mxu0 0.0
    %103 = vmatpush1.xpose.msra.mxu0 0.0
    %104 = vmatprep.subr.mxu0 0.0
    %105 = vmatpush1.xpose.msra.mxu0 0.0
    %106 = vmatprep.subr.mxu0 0.0
    %107 = vmatpush1.xpose.msra.mxu0 0.0
    %108 = vmatprep.subr.mxu0 0.0
    %109 = vmatpush1.xpose.msra.mxu0 0.0
    %110 = vmatprep.subr.mxu0 0.0
    %111 = vmatpush1.xpose.msra.mxu0 0.0
    %112 = vmatprep.subr.mxu0 0.0
    %113 = vmatpush1.xpose.msra.mxu0 0.0
    %114 = vmatprep.subr.mxu0 0.0
    %115 = vmatpush1.xpose.msra.mxu0 0.0
    %116 = vmatprep.subr.mxu0 0.0
    %117 = vmatpush1.xpose.msra.mxu0 0.0
    %118 = vmatprep.subr.mxu0 0.0
    %119 = vmatpush1.xpose.msra.mxu0 0.0
    %120 = vmatprep.subr.mxu0 0.0
    %121 = vmatpush1.xpose.msra.mxu0 0.0
    %122 = vmatprep.subr.mxu0 0.0
    %123 = vmatpush1.xpose.msra.mxu0 0.0
    %124 = vmatprep.subr.mxu0 0.0
    %125 = vmatpush1.xpose.msra.mxu0 0.0
    %126 = vmatprep.mubr.f32.mxu0 %v40
    %127 = vmatmul.mubr.f32.gmra.mrb[0].mxu0 %v39
    %v128 = vpop.f32.mrb[0].mxu0
    %v129 = vadd.f32 %v60, %v128
    %v130 = vpop.f32.mrb[0].mxu0
    %131 = vdwg.mxu0
    %132 = vmatprep.subr.mxu0 %v50
    %133 = vmatpush1.xpose.msra.mxu0 %v49
    %134 = vmatprep.subr.mxu0 0.0
    %135 = vmatpush1.xpose.msra.mxu0 0.0
    %136 = vmatprep.subr.mxu0 0.0
    %137 = vmatpush1.xpose.msra.mxu0 0.0
    %138 = vmatprep.subr.mxu0 0.0
    %139 = vmatpush1.xpose.msra.mxu0 0.0
    %140 = vmatprep.subr.mxu0 0.0
    %141 = vmatpush1.xpose.msra.mxu0 0.0
    %142 = vmatprep.subr.mxu0 0.0
    %143 = vmatpush1.xpose.msra.mxu0 0.0
    %144 = vmatprep.subr.mxu0 0.0
    %145 = vmatpush1.xpose.msra.mxu0 0.0
    %146 = vmatprep.subr.mxu0 0.0
    %147 = vmatpush1.xpose.msra.mxu0 0.0
    %148 = vmatprep.subr.mxu0 0.0
    %149 = vmatpush1.xpose.msra.mxu0 0.0
    %150 = vmatprep.subr.mxu0 0.0
    %151 = vmatpush1.xpose.msra.mxu0 0.0
    %152 = vmatprep.subr.mxu0 0.0
    %153 = vmatpush1.xpose.msra.mxu0 0.0
    %154 = vmatprep.subr.mxu0 0.0
    %155 = vmatpush1.xpose.msra.mxu0 0.0
    %156 = vmatprep.subr.mxu0 0.0
    %157 = vmatpush1.xpose.msra.mxu0 0.0
    %158 = vmatprep.subr.mxu0 0.0
    %159 = vmatpush1.xpose.msra.mxu0 0.0
    %160 = vmatprep.subr.mxu0 0.0
    %161 = vmatpush1.xpose.msra.mxu0 0.0
    %162 = vmatprep.subr.mxu0 0.0
    %163 = vmatpush1.xpose.msra.mxu0 0.0
    %164 = vmatprep.subr.mxu0 0.0
    %165 = vmatpush1.xpose.msra.mxu0 0.0
    %166 = vmatprep.subr.mxu0 0.0
    %167 = vmatpush1.xpose.msra.mxu0 0.0
    %168 = vmatprep.subr.mxu0 0.0
    %169 = vmatpush1.xpose.msra.mxu0 0.0
    %170 = vmatprep.subr.mxu0 0.0
    %171 = vmatpush1.xpose.msra.mxu0 0.0
    %172 = vmatprep.subr.mxu0 0.0
    %173 = vmatpush1.xpose.msra.mxu0 0.0
    %174 = vmatprep.subr.mxu0 0.0
    %175 = vmatpush1.xpose.msra.mxu0 0.0
    %176 = vmatprep.subr.mxu0 0.0
    %177 = vmatpush1.xpose.msra.mxu0 0.0
    %178 = vmatprep.subr.mxu0 0.0
    %179 = vmatpush1.xpose.msra.mxu0 0.0
    %180 = vmatprep.subr.mxu0 0.0
    %181 = vmatpush1.xpose.msra.mxu0 0.0
    %182 = vmatprep.subr.mxu0 0.0
    %183 = vmatpush1.xpose.msra.mxu0 0.0
    %184 = vmatprep.subr.mxu0 0.0
    %185 = vmatpush1.xpose.msra.mxu0 0.0
    %186 = vmatprep.subr.mxu0 0.0
    %187 = vmatpush1.xpose.msra.mxu0 0.0
    %188 = vmatprep.subr.mxu0 0.0
    %189 = vmatpush1.xpose.msra.mxu0 0.0
    %190 = vmatprep.subr.mxu0 0.0
    %191 = vmatpush1.xpose.msra.mxu0 0.0
    %192 = vmatprep.subr.mxu0 0.0
    %193 = vmatpush1.xpose.msra.mxu0 0.0
    %194 = vmatprep.subr.mxu0 0.0
    %195 = vmatpush1.xpose.msra.mxu0 0.0
    %196 = vmatprep.mubr.f32.mxu0 %v42
    %197 = vmatmul.mubr.f32.gmra.mrb[0].mxu0 %v41
    %v198 = vpop.f32.mrb[0].mxu0
    %v199 = vadd.f32 %v129, %v198
    %v200 = vpop.f32.mrb[0].mxu0
    %201 = vdwg.mxu0
    %202 = vmatprep.subr.mxu0 %v52
    %203 = vmatpush1.xpose.msra.mxu0 %v51
    %204 = vmatprep.subr.mxu0 0.0
    %205 = vmatpush1.xpose.msra.mxu0 0.0
    %206 = vmatprep.subr.mxu0 0.0
    %207 = vmatpush1.xpose.msra.mxu0 0.0
    %208 = vmatprep.subr.mxu0 0.0
    %209 = vmatpush1.xpose.msra.mxu0 0.0
    %210 = vmatprep.subr.mxu0 0.0
    %211 = vmatpush1.xpose.msra.mxu0 0.0
    %212 = vmatprep.subr.mxu0 0.0
    %213 = vmatpush1.xpose.msra.mxu0 0.0
    %214 = vmatprep.subr.mxu0 0.0
    %215 = vmatpush1.xpose.msra.mxu0 0.0
    %216 = vmatprep.subr.mxu0 0.0
    %217 = vmatpush1.xpose.msra.mxu0 0.0
    %218 = vmatprep.subr.mxu0 0.0
    %219 = vmatpush1.xpose.msra.mxu0 0.0
    %220 = vmatprep.subr.mxu0 0.0
    %221 = vmatpush1.xpose.msra.mxu0 0.0
    %222 = vmatprep.subr.mxu0 0.0
    %223 = vmatpush1.xpose.msra.mxu0 0.0
    %224 = vmatprep.subr.mxu0 0.0
    %225 = vmatpush1.xpose.msra.mxu0 0.0
    %226 = vmatprep.subr.mxu0 0.0
    %227 = vmatpush1.xpose.msra.mxu0 0.0
    %228 = vmatprep.subr.mxu0 0.0
    %229 = vmatpush1.xpose.msra.mxu0 0.0
    %230 = vmatprep.subr.mxu0 0.0
    %231 = vmatpush1.xpose.msra.mxu0 0.0
    %232 = vmatprep.subr.mxu0 0.0
    %233 = vmatpush1.xpose.msra.mxu0 0.0
    %234 = vmatprep.subr.mxu0 0.0
    %235 = vmatpush1.xpose.msra.mxu0 0.0
    %236 = vmatprep.subr.mxu0 0.0
    %237 = vmatpush1.xpose.msra.mxu0 0.0
    %238 = vmatprep.subr.mxu0 0.0
    %239 = vmatpush1.xpose.msra.mxu0 0.0
    %240 = vmatprep.subr.mxu0 0.0
    %241 = vmatpush1.xpose.msra.mxu0 0.0
    %242 = vmatprep.subr.mxu0 0.0
    %243 = vmatpush1.xpose.msra.mxu0 0.0
    %244 = vmatprep.subr.mxu0 0.0
    %245 = vmatpush1.xpose.msra.mxu0 0.0
    %246 = vmatprep.subr.mxu0 0.0
    %247 = vmatpush1.xpose.msra.mxu0 0.0
    %248 = vmatprep.subr.mxu0 0.0
    %249 = vmatpush1.xpose.msra.mxu0 0.0
    %250 = vmatprep.subr.mxu0 0.0
    %251 = vmatpush1.xpose.msra.mxu0 0.0
    %252 = vmatprep.subr.mxu0 0.0
    %253 = vmatpush1.xpose.msra.mxu0 0.0
    %254 = vmatprep.subr.mxu0 0.0
    %255 = vmatpush1.xpose.msra.mxu0 0.0
    %256 = vmatprep.subr.mxu0 0.0
    %257 = vmatpush1.xpose.msra.mxu0 0.0
    %258 = vmatprep.subr.mxu0 0.0
    %259 = vmatpush1.xpose.msra.mxu0 0.0
    %260 = vmatprep.subr.mxu0 0.0
    %261 = vmatpush1.xpose.msra.mxu0 0.0
    %262 = vmatprep.subr.mxu0 0.0
    %263 = vmatpush1.xpose.msra.mxu0 0.0
    %264 = vmatprep.subr.mxu0 0.0
    %265 = vmatpush1.xpose.msra.mxu0 0.0
    %266 = vmatprep.mubr.f32.mxu0 %v44
    %267 = vmatmul.mubr.f32.gmra.mrb[0].mxu0 %v43
    %v268 = vpop.f32.mrb[0].mxu0
    %v269 = vadd.f32 %v199, %v268
    %v270 = vpop.f32.mrb[0].mxu0
    %271 = vdwg.mxu0
    %272 = vmatprep.subr.mxu0 %v54
    %273 = vmatpush1.xpose.msra.mxu0 %v53
    %274 = vmatprep.subr.mxu0 0.0
    %275 = vmatpush1.xpose.msra.mxu0 0.0
    %276 = vmatprep.subr.mxu0 0.0
    %277 = vmatpush1.xpose.msra.mxu0 0.0
    %278 = vmatprep.subr.mxu0 0.0
    %279 = vmatpush1.xpose.msra.mxu0 0.0
    %280 = vmatprep.subr.mxu0 0.0
    %281 = vmatpush1.xpose.msra.mxu0 0.0
    %282 = vmatprep.subr.mxu0 0.0
    %283 = vmatpush1.xpose.msra.mxu0 0.0
    %284 = vmatprep.subr.mxu0 0.0
    %285 = vmatpush1.xpose.msra.mxu0 0.0
    %286 = vmatprep.subr.mxu0 0.0
    %287 = vmatpush1.xpose.msra.mxu0 0.0
    %288 = vmatprep.subr.mxu0 0.0
    %289 = vmatpush1.xpose.msra.mxu0 0.0
    %290 = vmatprep.subr.mxu0 0.0
    %291 = vmatpush1.xpose.msra.mxu0 0.0
    %292 = vmatprep.subr.mxu0 0.0
    %293 = vmatpush1.xpose.msra.mxu0 0.0
    %294 = vmatprep.subr.mxu0 0.0
    %295 = vmatpush1.xpose.msra.mxu0 0.0
    %296 = vmatprep.subr.mxu0 0.0
    %297 = vmatpush1.xpose.msra.mxu0 0.0
    %298 = vmatprep.subr.mxu0 0.0
    %299 = vmatpush1.xpose.msra.mxu0 0.0
    %300 = vmatprep.subr.mxu0 0.0
    %301 = vmatpush1.xpose.msra.mxu0 0.0
    %302 = vmatprep.subr.mxu0 0.0
    %303 = vmatpush1.xpose.msra.mxu0 0.0
    %304 = vmatprep.subr.mxu0 0.0
    %305 = vmatpush1.xpose.msra.mxu0 0.0
    %306 = vmatprep.subr.mxu0 0.0
    %307 = vmatpush1.xpose.msra.mxu0 0.0
    %308 = vmatprep.subr.mxu0 0.0
    %309 = vmatpush1.xpose.msra.mxu0 0.0
    %310 = vmatprep.subr.mxu0 0.0
    %311 = vmatpush1.xpose.msra.mxu0 0.0
    %312 = vmatprep.subr.mxu0 0.0
    %313 = vmatpush1.xpose.msra.mxu0 0.0
    %314 = vmatprep.subr.mxu0 0.0
    %315 = vmatpush1.xpose.msra.mxu0 0.0
    %316 = vmatprep.subr.mxu0 0.0
    %317 = vmatpush1.xpose.msra.mxu0 0.0
    %318 = vmatprep.subr.mxu0 0.0
    %319 = vmatpush1.xpose.msra.mxu0 0.0
    %320 = vmatprep.subr.mxu0 0.0
    %321 = vmatpush1.xpose.msra.mxu0 0.0
    %322 = vmatprep.subr.mxu0 0.0
    %323 = vmatpush1.xpose.msra.mxu0 0.0
    %324 = vmatprep.subr.mxu0 0.0
    %325 = vmatpush1.xpose.msra.mxu0 0.0
    %326 = vmatprep.subr.mxu0 0.0
    %327 = vmatpush1.xpose.msra.mxu0 0.0
    %328 = vmatprep.subr.mxu0 0.0
    %329 = vmatpush1.xpose.msra.mxu0 0.0
    %330 = vmatprep.subr.mxu0 0.0
    %331 = vmatpush1.xpose.msra.mxu0 0.0
    %332 = vmatprep.subr.mxu0 0.0
    %333 = vmatpush1.xpose.msra.mxu0 0.0
    %334 = vmatprep.subr.mxu0 0.0
    %335 = vmatpush1.xpose.msra.mxu0 0.0
    %336 = vmatprep.mubr.f32.mxu0 %v46
    %337 = vmatmul.mubr.f32.gmra.mrb[0].mxu0 %v45
    %v338 = vpop.f32.mrb[0].mxu0
    %v339 = vadd.f32 %v269, %v338
    %v340 = vpop.f32.mrb[0].mxu0
    %341 = vdwg.mxu0
    %vm342 = vcmask 64512
    %343 = vst.msk [vmem:[#allocation7] sm:$0xff] %vm342, %v339
    // Predicated region
    $region22: #{logistic_regression_forward.1} parent=1 // pred_check
      _
    $region23: #{logistic_regression_forward.1} parent=1 // pred_check_branch
      %345 = sbr.rel (0) target = $region25
    $region24: #{logistic_regression_forward.1} parent=1 // pred_region
      %s347 = ssub.s32 128, 128
      %348 = vsyncadd [#allocation4], %s347
      %s350 = sshll.u32 [#allocation7], 4
      %s351 = int_to_ptr.vmem [resolvable:$true] %s350
      %353 = dma.vmem_to_hbm [thread:$0]  %s351, 128, %s3, [#allocation4]
    $region25: #{logistic_regression_forward.1} parent=1 // pred_fallthru
      _
    // Predicated region
    $region26: #{logistic_regression_forward.1} parent=1 // pred_check
      _
    $region27: #{logistic_regression_forward.1} parent=1 // pred_check_branch
      %355 = sbr.rel (0) target = $region29
    $region28: #{logistic_regression_forward.1} parent=1 // pred_region
      %356 = dma.done [#allocation4], 128
    $region29: #{logistic_regression_forward.1} parent=1 // pred_fallthru
      _
    %357 = vsyncpa [#allocation3], 1
    %358 = vsyncpa [#allocation6], 1
    %359 = vsyncpa [#allocation4], 1

</llo_original>
